<compile_context>
chip_gen: v7x
topology: tpu7x:2x2x1
jax: 0.10.0
libtpu: 0.0.40
codegen_flags: <defaults>
</compile_context>

<pallas_src>
import math

import jax
import jax.numpy as jnp
from jax.experimental import pallas as pl
from jax.experimental.pallas import tpu as pltpu


# ----------------------------- Pallas kernel ------------------------------- #

def _fused_conv2x_bn_relu_kernel(x_ref, w1_ref, b1_ref, w2_ref, b2_ref, o_ref):
    # x_ref : (Nb, H, W*Cin)          input rows, channels packed on lanes
    # w1_ref: (3, W*Cin,  W*Cmid_p)   banded conv1 weights, one per vertical tap
    # b1_ref: (1, W*Cmid_p)           conv1 bias tiled over W (zero in pad cols)
    # w2_ref: (3, W*Cmid_p, W*Cout)   banded conv2 weights with BN scale folded
    # b2_ref: (1, W*Cout)             conv2 bias * scale + BN shift, tiled over W
    # o_ref : (Nb, H, W*Cout)
    Nb, H, WCo = o_ref.shape
    WCi = x_ref.shape[2]
    M = Nb * H

    x = x_ref[...].reshape(M, WCi)

    # Per-image row masks for the "same" padding along H.  The block holds Nb
    # whole images stacked along rows, so image boundaries sit at multiples of
    # H and the rolled rows that wrap across images are exactly the masked ones.
    row = jax.lax.broadcasted_iota(jnp.int32, (M, 1), 0)
    is_first = (row % H) == 0
    is_last = (row % H) == (H - 1)

    def shift_up(a):   # output row h gets row h-1 (zero at each image's top)
        return jnp.where(is_first, 0.0, pltpu.roll(a, 1, axis=0))

    def shift_dn(a):   # output row h gets row h+1 (zero at each image's bottom)
        return jnp.where(is_last, 0.0, pltpu.roll(a, M - 1, axis=0))

    # ---- conv1 (3x3, pad 1): three banded matmuls over rolled row views ----
    h = jnp.dot(shift_up(x), w1_ref[0], preferred_element_type=jnp.float32)
    h = h + b1_ref[...]
    h = h + jnp.dot(x, w1_ref[1], preferred_element_type=jnp.float32)
    h = h + jnp.dot(shift_dn(x), w1_ref[2], preferred_element_type=jnp.float32)

    # ---- conv2 + folded BatchNorm + ReLU; intermediate stays in vregs/VMEM --
    # TODO(synk): nn.Dropout2d(p=0.5) is identity in eval mode; training-mode
    # channel dropout is not reproduced here.
    y = jnp.dot(shift_up(h), w2_ref[0], preferred_element_type=jnp.float32)
    y = y + b2_ref[...]                      # bias + BN shift (scale folded in w2)
    y = y + jnp.dot(h, w2_ref[1], preferred_element_type=jnp.float32)
    y = y + jnp.dot(shift_dn(h), w2_ref[2], preferred_element_type=jnp.float32)

    o_ref[...] = jnp.maximum(y, 0.0).reshape(Nb, H, WCo)   # ReLU


def fused_keepsize_conv2x(x_rows, w1_band, b1_row, w2_band, b2_row, nb):
    """x_rows: (N, H, W*Cin) f32. Returns (N, H, W*Cout) f32."""
    N, H, WCi = x_rows.shape
    WCm = w1_band.shape[-1]
    WCo = w2_band.shape[-1]
    assert N % nb == 0
    return pl.pallas_call(
        _fused_conv2x_bn_relu_kernel,
        out_shape=jax.ShapeDtypeStruct((N, H, WCo), jnp.float32),
        grid=(N // nb,),
        in_specs=[
            pl.BlockSpec((nb, H, WCi), lambda n: (n, 0, 0)),
            pl.BlockSpec((3, WCi, WCm), lambda n: (0, 0, 0)),
            pl.BlockSpec((1, WCm), lambda n: (0, 0)),
            pl.BlockSpec((3, WCm, WCo), lambda n: (0, 0, 0)),
            pl.BlockSpec((1, WCo), lambda n: (0, 0)),
        ],
        out_specs=pl.BlockSpec((nb, H, WCo), lambda n: (n, 0, 0)),
        compiler_params=pltpu.CompilerParams(
            dimension_semantics=("parallel",),
            vmem_limit_bytes=32 * 1024 * 1024),
    )(x_rows, w1_band, b1_row, w2_band, b2_row)


# ----------------------- wrapper-side weight preparation -------------------- #

def _band_conv_weight(w_oihw, width, col_scale=None):
    """PyTorch (Cout, Cin, 3, 3) conv weight -> (3, W*Cin, W*Cout) banded
    matrices: band[dy][wi*Cin+ci, wo*Cout+co] = w[co, ci, dy, wi-wo+1] when
    |wi - wo| <= 1, else 0.  Folds horizontal taps and W-direction zero
    padding into the matmul (implicit im2col).  Optionally folds a
    per-output-channel scale (eval-mode BatchNorm) into the columns."""
    W = width
    k = jnp.transpose(w_oihw.astype(jnp.float32), (2, 3, 1, 0))   # (3,3,Cin,Cout)
    wi = jnp.arange(W)[:, None]
    wo = jnp.arange(W)[None, :]
    d = wi - wo + 1                                               # tap index
    valid = ((d >= 0) & (d <= 2)).astype(jnp.float32)             # (W, W)
    band = k[:, jnp.clip(d, 0, 2), :, :]                          # (3,W,W,Cin,Cout)
    band = band * valid[None, :, :, None, None]
    if col_scale is not None:
        band = band * col_scale[None, None, None, None, :]
    band = jnp.transpose(band, (0, 1, 3, 2, 4))                   # (3,W,Cin,W,Cout)
    Cin, Cout = band.shape[2], band.shape[4]
    return band.reshape(3, W * Cin, W * Cout)


def _pad_mid_channels(c_mid, width, lane=128):
    """Smallest c >= c_mid with (width * c) % lane == 0 (falls back to c_mid)."""
    for c in range(c_mid, c_mid + lane + 1):
        if (width * c) % lane == 0:
            return c
    return c_mid


def _pick_batch_tile(N, H, target_rows=128):
    """Images per grid step: grow M = Nb*H toward 128 but keep >= 2 grid steps
    so dimension_semantics=('parallel',) can still split across TensorCores."""
    cap = max(1, target_rows // max(H, 1))
    if N >= 2:
        cap = max(1, min(cap, N // 2))
    for nb in range(cap, 0, -1):
        if N % nb == 0:
            return nb
    return 1


# --------------------------- Module (JAX wrapper) --------------------------- #

class KeepSizeConv2dLayerx2:
    def __init__(self, in_channels: int, out_channels: int, key):
        mid_channels = math.ceil(math.sqrt(in_channels * out_channels))
        self.in_channels, self.mid_channels, self.out_channels = (
            in_channels, mid_channels, out_channels)
        k1, k2, k3, k4, k5, k6 = jax.random.split(key, 6)

        def init_conv(k, cin, cout):
            kw, kb = jax.random.split(k)
            bound = 1.0 / math.sqrt(cin * 9)
            w = jax.random.uniform(kw, (cout, cin, 3, 3), jnp.float32, -bound, bound)
            b = jax.random.uniform(kb, (cout,), jnp.float32, -bound, bound)
            return w, b

        # PyTorch-convention conv weights: (Cout, Cin, 3, 3)
        self.w1, self.b1 = init_conv(k1, in_channels, mid_channels)
        self.w2, self.b2 = init_conv(k2, mid_channels, out_channels)
        # BatchNorm2d parameters / running stats (deterministic synthetic).
        self.gamma = jax.random.uniform(k3, (out_channels,), jnp.float32, 0.5, 1.5)
        self.beta = 0.1 * jax.random.normal(k4, (out_channels,), jnp.float32)
        self.running_mean = 0.1 * jax.random.normal(k5, (out_channels,), jnp.float32)
        self.running_var = jax.random.uniform(k6, (out_channels,), jnp.float32, 0.5, 1.5)
        self.eps = 1e-5

    def __call__(self, x_nchw):
        N, Cin, H, W = x_nchw.shape
        # NCHW (PyTorch boundary) -> rows x (W*C) lane-packed layout.
        x = jnp.transpose(x_nchw, (0, 2, 3, 1)).astype(jnp.float32)
        x_rows = x.reshape(N, H, W * Cin)

        inv_std = 1.0 / jnp.sqrt(self.running_var + self.eps)
        scale = self.gamma * inv_std                               # per Cout
        shift = self.beta - self.running_mean * scale

        # Pad mid channels so W*Cmid hits a multiple of 128 (lane-dense conv1
        # output / conv2 K dim).  Extra channels carry zero weights+bias.
        cm = self.mid_channels
        cm_pad = _pad_mid_channels(cm, W)
        w1p = jnp.pad(self.w1, ((0, cm_pad - cm), (0, 0), (0, 0), (0, 0)))
        b1p = jnp.pad(self.b1, (0, cm_pad - cm))
        w2p = jnp.pad(self.w2, ((0, 0), (0, cm_pad - cm), (0, 0), (0, 0)))

        w1_band = _band_conv_weight(w1p, W)                    # (3, W*Cin, W*Cmid_p)
        w2_band = _band_conv_weight(w2p, W, col_scale=scale)   # BN scale folded
        b1_row = jnp.tile(b1p, (W,))[None, :]                  # (1, W*Cmid_p)
        b2_row = jnp.tile(self.b2 * scale + shift, (W,))[None, :]  # (1, W*Cout)

        nb = _pick_batch_tile(N, H)
        y = fused_keepsize_conv2x(x_rows, w1_band, b1_row, w2_band, b2_row, nb)
        y = y.reshape(N, H, W, self.out_channels)
        return jnp.transpose(y, (0, 3, 1, 2))                  # back to NCHW


# ------------------------------ reference (JAX) ----------------------------- #

def _reference_forward(m: KeepSizeConv2dLayerx2, x_nchw):
    x = x_nchw.astype(jnp.float32)

    def conv(x, w, b):
        y = jax.lax.conv_general_dilated(
            x, w, window_strides=(1, 1), padding=((1, 1), (1, 1)),
            dimension_numbers=("NCHW", "OIHW", "NCHW"))
        return y + b[None, :, None, None]

    h = conv(x, m.w1, m.b1)
    y = conv(h, m.w2, m.b2)
    inv_std = 1.0 / jnp.sqrt(m.running_var + m.eps)
    y = (y - m.running_mean[None, :, None, None]) * (m.gamma * inv_std)[None, :, None, None] \
        + m.beta[None, :, None, None]
    return jnp.maximum(y, 0.0)


# ----------------------------------- main ----------------------------------- #

if __name__ == "__main__":
    key = jax.random.PRNGKey(0)
    k_param, k_x = jax.random.split(key)

    in_channels, out_channels = 4, 8      # mid = ceil(sqrt(32)) = 6 -> padded to 8
    N, H, W = 2, 16, 16                   # W * out_channels = 128 (lane-dense)

    module = KeepSizeConv2dLayerx2(in_channels, out_channels, k_param)
    x = jax.random.normal(k_x, (N, in_channels, H, W), jnp.float32)

    out = jax.block_until_ready(module(x))
    ref = jax.block_until_ready(_reference_forward(module, x))

    assert out.shape == (N, out_channels, H, W), out.shape
    assert jnp.allclose(out, ref, atol=1e-4, rtol=1e-4), \
        f"max abs err {float(jnp.max(jnp.abs(out - ref)))}"

    print("KERNEL_OK")
</pallas_src>

<mosaic_0001>
module attributes {stable_mosaic.version = 11 : i64} {
  func.func @_fused_conv2x_bn_relu_kernel(%arg0: i32, %arg1: memref<1x16x64xf32, #tpu.memory_space<vmem>>, %arg2: memref<3x64x128xf32, #tpu.memory_space<vmem>>, %arg3: memref<1x128xf32, #tpu.memory_space<vmem>>, %arg4: memref<3x128x128xf32, #tpu.memory_space<vmem>>, %arg5: memref<1x128xf32, #tpu.memory_space<vmem>>, %arg6: memref<1x16x128xf32, #tpu.memory_space<vmem>>) attributes {dimension_semantics = [#tpu.dimension_semantics<parallel>], iteration_bounds = array<i64: 2>, scalar_prefetch = 0 : i64, scratch_operands = 0 : i64, tpu.core_type = #tpu.core_type<tc>, window_params = [{transform_indices = @transform_0, window_bounds = array<i64: 1, 16, 64>}, {pipeline_mode = #tpu.pipeline_mode<synchronous>, transform_indices = @transform_1, window_bounds = array<i64: 3, 64, 128>}, {pipeline_mode = #tpu.pipeline_mode<synchronous>, transform_indices = @transform_2, window_bounds = array<i64: 1, 128>}, {pipeline_mode = #tpu.pipeline_mode<synchronous>, transform_indices = @transform_3, window_bounds = array<i64: 3, 128, 128>}, {pipeline_mode = #tpu.pipeline_mode<synchronous>, transform_indices = @transform_4, window_bounds = array<i64: 1, 128>}, {transform_indices = @transform_5, window_bounds = array<i64: 1, 16, 128>}]} {
    %c0 = arith.constant 0 : index
    %c0_0 = arith.constant 0 : index
    %c0_1 = arith.constant 0 : index
    %0 = vector.load %arg1[%c0, %c0_0, %c0_1] : memref<1x16x64xf32, #tpu.memory_space<vmem>>, vector<1x16x64xf32>
    %1 = vector.shape_cast %0 : vector<1x16x64xf32> to vector<16x64xf32>
    %2 = tpu.iota {dimensions = array<i32: 0>} : vector<16x1xi32>
    %c16_i32 = arith.constant 16 : i32
    %c0_i32 = arith.constant 0 : i32
    %3 = arith.cmpi eq, %c16_i32, %c0_i32 : i32
    %c1_i32 = arith.constant 1 : i32
    %4 = arith.select %3, %c1_i32, %c16_i32 : i32
    %5 = vector.broadcast %4 : i32 to vector<16x1xi32>
    %6 = arith.remsi %2, %5 : vector<16x1xi32>
    %c0_i32_2 = arith.constant 0 : i32
    %7 = vector.broadcast %c0_i32_2 : i32 to vector<16x1xi32>
    %8 = arith.cmpi ne, %6, %7 : vector<16x1xi32>
    %c0_i32_3 = arith.constant 0 : i32
    %9 = vector.broadcast %c0_i32_3 : i32 to vector<16x1xi32>
    %10 = arith.cmpi slt, %6, %9 : vector<16x1xi32>
    %c0_i32_4 = arith.constant 0 : i32
    %11 = arith.cmpi slt, %4, %c0_i32_4 : i32
    %12 = vector.broadcast %11 : i1 to vector<16x1xi1>
    %13 = vector.broadcast %12 : vector<16x1xi1> to vector<16x1xi1>
    %14 = arith.xori %10, %13 : vector<16x1xi1>
    %15 = arith.andi %14, %8 : vector<16x1xi1>
    %16 = vector.broadcast %4 : i32 to vector<16x1xi32>
    %17 = arith.addi %6, %16 : vector<16x1xi32>
    %18 = arith.select %15, %17, %6 : vector<16x1xi1>, vector<16x1xi32>
    %c0_i32_5 = arith.constant 0 : i32
    %19 = vector.broadcast %c0_i32_5 : i32 to vector<16x1xi32>
    %20 = arith.cmpi eq, %18, %19 : vector<16x1xi32>
    %c16_i32_6 = arith.constant 16 : i32
    %c0_i32_7 = arith.constant 0 : i32
    %21 = arith.cmpi eq, %c16_i32_6, %c0_i32_7 : i32
    %c1_i32_8 = arith.constant 1 : i32
    %22 = arith.select %21, %c1_i32_8, %c16_i32_6 : i32
    %23 = vector.broadcast %22 : i32 to vector<16x1xi32>
    %24 = arith.remsi %2, %23 : vector<16x1xi32>
    %c0_i32_9 = arith.constant 0 : i32
    %25 = vector.broadcast %c0_i32_9 : i32 to vector<16x1xi32>
    %26 = arith.cmpi ne, %24, %25 : vector<16x1xi32>
    %c0_i32_10 = arith.constant 0 : i32
    %27 = vector.broadcast %c0_i32_10 : i32 to vector<16x1xi32>
    %28 = arith.cmpi slt, %24, %27 : vector<16x1xi32>
    %c0_i32_11 = arith.constant 0 : i32
    %29 = arith.cmpi slt, %22, %c0_i32_11 : i32
    %30 = vector.broadcast %29 : i1 to vector<16x1xi1>
    %31 = vector.broadcast %30 : vector<16x1xi1> to vector<16x1xi1>
    %32 = arith.xori %28, %31 : vector<16x1xi1>
    %33 = arith.andi %32, %26 : vector<16x1xi1>
    %34 = vector.broadcast %22 : i32 to vector<16x1xi32>
    %35 = arith.addi %24, %34 : vector<16x1xi32>
    %36 = arith.select %33, %35, %24 : vector<16x1xi1>, vector<16x1xi32>
    %c15_i32 = arith.constant 15 : i32
    %37 = vector.broadcast %c15_i32 : i32 to vector<16x1xi32>
    %38 = arith.cmpi eq, %36, %37 : vector<16x1xi32>
    %c1_i32_12 = arith.constant 1 : i32
    %39 = tpu.dynamic_rotate %1 by %c1_i32_12 dim 0 : vector<16x64xf32>, i32 -> vector<16x64xf32>
    %cst = arith.constant 0.000000e+00 : f32
    %40 = vector.shape_cast %20 : vector<16x1xi1> to vector<16x1xi1>
    %41 = vector.broadcast %40 : vector<16x1xi1> to vector<16x64xi1>
    %42 = vector.broadcast %cst : f32 to vector<16x64xf32>
    %43 = arith.select %41, %42, %39 : vector<16x64xi1>, vector<16x64xf32>
    %c0_13 = arith.constant 0 : index
    %c0_14 = arith.constant 0 : index
    %c0_15 = arith.constant 0 : index
    %44 = vector.load %arg2[%c0_13, %c0_14, %c0_15] : memref<3x64x128xf32, #tpu.memory_space<vmem>>, vector<1x64x128xf32>
    %45 = vector.shape_cast %44 : vector<1x64x128xf32> to vector<64x128xf32>
    %cst_16 = arith.constant dense<0.000000e+00> : vector<16x128xf32>
    %46 = tpu.matmul %43, %45, %cst_16 {dimension_numbers = #tpu.dot_dimension_numbers<[1], [0], [0], [1], [0, 0, 1, 1], [], []>} : vector<16x64xf32>, vector<64x128xf32>, vector<16x128xf32> -> vector<16x128xf32>
    %c0_17 = arith.constant 0 : index
    %c0_18 = arith.constant 0 : index
    %47 = vector.load %arg3[%c0_17, %c0_18] : memref<1x128xf32, #tpu.memory_space<vmem>>, vector<1x128xf32>
    %48 = vector.broadcast %47 : vector<1x128xf32> to vector<16x128xf32>
    %49 = arith.addf %46, %48 : vector<16x128xf32>
    %c1 = arith.constant 1 : index
    %c0_19 = arith.constant 0 : index
    %c0_20 = arith.constant 0 : index
    %50 = vector.load %arg2[%c1, %c0_19, %c0_20] : memref<3x64x128xf32, #tpu.memory_space<vmem>>, vector<1x64x128xf32>
    %51 = vector.shape_cast %50 : vector<1x64x128xf32> to vector<64x128xf32>
    %cst_21 = arith.constant dense<0.000000e+00> : vector<16x128xf32>
    %52 = tpu.matmul %1, %51, %cst_21 {dimension_numbers = #tpu.dot_dimension_numbers<[1], [0], [0], [1], [0, 0, 1, 1], [], []>} : vector<16x64xf32>, vector<64x128xf32>, vector<16x128xf32> -> vector<16x128xf32>
    %53 = arith.addf %49, %52 : vector<16x128xf32>
    %c15_i32_22 = arith.constant 15 : i32
    %54 = tpu.dynamic_rotate %1 by %c15_i32_22 dim 0 : vector<16x64xf32>, i32 -> vector<16x64xf32>
    %cst_23 = arith.constant 0.000000e+00 : f32
    %55 = vector.shape_cast %38 : vector<16x1xi1> to vector<16x1xi1>
    %56 = vector.broadcast %55 : vector<16x1xi1> to vector<16x64xi1>
    %57 = vector.broadcast %cst_23 : f32 to vector<16x64xf32>
    %58 = arith.select %56, %57, %54 : vector<16x64xi1>, vector<16x64xf32>
    %c2 = arith.constant 2 : index
    %c0_24 = arith.constant 0 : index
    %c0_25 = arith.constant 0 : index
    %59 = vector.load %arg2[%c2, %c0_24, %c0_25] : memref<3x64x128xf32, #tpu.memory_space<vmem>>, vector<1x64x128xf32>
    %60 = vector.shape_cast %59 : vector<1x64x128xf32> to vector<64x128xf32>
    %cst_26 = arith.constant dense<0.000000e+00> : vector<16x128xf32>
    %61 = tpu.matmul %58, %60, %cst_26 {dimension_numbers = #tpu.dot_dimension_numbers<[1], [0], [0], [1], [0, 0, 1, 1], [], []>} : vector<16x64xf32>, vector<64x128xf32>, vector<16x128xf32> -> vector<16x128xf32>
    %62 = arith.addf %53, %61 : vector<16x128xf32>
    %c1_i32_27 = arith.constant 1 : i32
    %63 = tpu.dynamic_rotate %62 by %c1_i32_27 dim 0 : vector<16x128xf32>, i32 -> vector<16x128xf32>
    %cst_28 = arith.constant 0.000000e+00 : f32
    %64 = vector.shape_cast %20 : vector<16x1xi1> to vector<16x1xi1>
    %65 = vector.broadcast %64 : vector<16x1xi1> to vector<16x128xi1>
    %66 = vector.broadcast %cst_28 : f32 to vector<16x128xf32>
    %67 = arith.select %65, %66, %63 : vector<16x128xi1>, vector<16x128xf32>
    %c0_29 = arith.constant 0 : index
    %c0_30 = arith.constant 0 : index
    %c0_31 = arith.constant 0 : index
    %68 = vector.load %arg4[%c0_29, %c0_30, %c0_31] : memref<3x128x128xf32, #tpu.memory_space<vmem>>, vector<1x128x128xf32>
    %69 = vector.shape_cast %68 : vector<1x128x128xf32> to vector<128x128xf32>
    %cst_32 = arith.constant dense<0.000000e+00> : vector<16x128xf32>
    %70 = tpu.matmul %67, %69, %cst_32 {dimension_numbers = #tpu.dot_dimension_numbers<[1], [0], [0], [1], [0, 0, 1, 1], [], []>} : vector<16x128xf32>, vector<128x128xf32>, vector<16x128xf32> -> vector<16x128xf32>
    %c0_33 = arith.constant 0 : index
    %c0_34 = arith.constant 0 : index
    %71 = vector.load %arg5[%c0_33, %c0_34] : memref<1x128xf32, #tpu.memory_space<vmem>>, vector<1x128xf32>
    %72 = vector.broadcast %71 : vector<1x128xf32> to vector<16x128xf32>
    %73 = arith.addf %70, %72 : vector<16x128xf32>
    %c1_35 = arith.constant 1 : index
    %c0_36 = arith.constant 0 : index
    %c0_37 = arith.constant 0 : index
    %74 = vector.load %arg4[%c1_35, %c0_36, %c0_37] : memref<3x128x128xf32, #tpu.memory_space<vmem>>, vector<1x128x128xf32>
    %75 = vector.shape_cast %74 : vector<1x128x128xf32> to vector<128x128xf32>
    %cst_38 = arith.constant dense<0.000000e+00> : vector<16x128xf32>
    %76 = tpu.matmul %62, %75, %cst_38 {dimension_numbers = #tpu.dot_dimension_numbers<[1], [0], [0], [1], [0, 0, 1, 1], [], []>} : vector<16x128xf32>, vector<128x128xf32>, vector<16x128xf32> -> vector<16x128xf32>
    %77 = arith.addf %73, %76 : vector<16x128xf32>
    %c15_i32_39 = arith.constant 15 : i32
    %78 = tpu.dynamic_rotate %62 by %c15_i32_39 dim 0 : vector<16x128xf32>, i32 -> vector<16x128xf32>
    %cst_40 = arith.constant 0.000000e+00 : f32
    %79 = vector.shape_cast %38 : vector<16x1xi1> to vector<16x1xi1>
    %80 = vector.broadcast %79 : vector<16x1xi1> to vector<16x128xi1>
    %81 = vector.broadcast %cst_40 : f32 to vector<16x128xf32>
    %82 = arith.select %80, %81, %78 : vector<16x128xi1>, vector<16x128xf32>
    %c2_41 = arith.constant 2 : index
    %c0_42 = arith.constant 0 : index
    %c0_43 = arith.constant 0 : index
    %83 = vector.load %arg4[%c2_41, %c0_42, %c0_43] : memref<3x128x128xf32, #tpu.memory_space<vmem>>, vector<1x128x128xf32>
    %84 = vector.shape_cast %83 : vector<1x128x128xf32> to vector<128x128xf32>
    %cst_44 = arith.constant dense<0.000000e+00> : vector<16x128xf32>
    %85 = tpu.matmul %82, %84, %cst_44 {dimension_numbers = #tpu.dot_dimension_numbers<[1], [0], [0], [1], [0, 0, 1, 1], [], []>} : vector<16x128xf32>, vector<128x128xf32>, vector<16x128xf32> -> vector<16x128xf32>
    %86 = arith.addf %77, %85 : vector<16x128xf32>
    %cst_45 = arith.constant 0.000000e+00 : f32
    %87 = vector.broadcast %cst_45 : f32 to vector<16x128xf32>
    %88 = arith.maximumf %86, %87 : vector<16x128xf32>
    %89 = vector.shape_cast %88 : vector<16x128xf32> to vector<1x16x128xf32>
    %c0_46 = arith.constant 0 : index
    %c0_47 = arith.constant 0 : index
    %c0_48 = arith.constant 0 : index
    %90 = vector.load %arg6[%c0_46, %c0_47, %c0_48] : memref<1x16x128xf32, #tpu.memory_space<vmem>>, vector<1x16x128xf32>
    tpu.vector_store %arg6[%c0_46, %c0_47, %c0_48], %89 {strides = array<i32>} : memref<1x16x128xf32, #tpu.memory_space<vmem>>, vector<1x16x128xf32>,
    return
  }
  func.func @transform_0(%arg0: i32) -> (i32, i32, i32) {
    %c0_i32 = arith.constant 0 : i32
    %c0_i32_0 = arith.constant 0 : i32
    %c0_i32_1 = arith.constant 0 : i32
    return %arg0, %c0_i32, %c0_i32_0 : i32, i32, i32
  }
  func.func @transform_1(%arg0: i32) -> (i32, i32, i32) {
    %c0_i32 = arith.constant 0 : i32
    %c0_i32_0 = arith.constant 0 : i32
    %c0_i32_1 = arith.constant 0 : i32
    %c0_i32_2 = arith.constant 0 : i32
    return %c0_i32, %c0_i32_0, %c0_i32_1 : i32, i32, i32
  }
  func.func @transform_2(%arg0: i32) -> (i32, i32) {
    %c0_i32 = arith.constant 0 : i32
    %c0_i32_0 = arith.constant 0 : i32
    %c0_i32_1 = arith.constant 0 : i32
    return %c0_i32, %c0_i32_0 : i32, i32
  }
  func.func @transform_3(%arg0: i32) -> (i32, i32, i32) {
    %c0_i32 = arith.constant 0 : i32
    %c0_i32_0 = arith.constant 0 : i32
    %c0_i32_1 = arith.constant 0 : i32
    %c0_i32_2 = arith.constant 0 : i32
    return %c0_i32, %c0_i32_0, %c0_i32_1 : i32, i32, i32
  }
  func.func @transform_4(%arg0: i32) -> (i32, i32) {
    %c0_i32 = arith.constant 0 : i32
    %c0_i32_0 = arith.constant 0 : i32
    %c0_i32_1 = arith.constant 0 : i32
    return %c0_i32, %c0_i32_0 : i32, i32
  }
  func.func @transform_5(%arg0: i32) -> (i32, i32, i32) {
    %c0_i32 = arith.constant 0 : i32
    %c0_i32_0 = arith.constant 0 : i32
    %c0_i32_1 = arith.constant 0 : i32
    return %arg0, %c0_i32, %c0_i32_0 : i32, i32, i32
  }
}

</mosaic_0001>

<llo_original>
// kernel: tpu_custom_call.1
$region0: #{tpu_custom_call.1}
  #allocation0 [shape = 'u32[]', space=smem, size = 0x4, offset = 0x4, fixed_abs, tag = 'smem constant byte address 0x4 - core index']
  #allocation1 [shape = 'u32[144,128]{1,0:T(1,128)}', space=vmem, size = 0x12000, scoped, tag = 'internal scratch']
  %s0 = inlined_call_operand.hbm [shape: f32[2,16,64], index: 0, kind: input, shape index: {}]
  %s1 = inlined_call_operand.hbm [shape: f32[3,64,128], index: 1, kind: input, shape index: {}]
  %s2 = inlined_call_operand.vmem [shape: f32[1,128], index: 2, kind: input, shape index: {}]
  %s3 = inlined_call_operand.hbm [shape: f32[3,128,128], index: 3, kind: input, shape index: {}]
  %s4 = inlined_call_operand.vmem [shape: f32[1,128], index: 4, kind: input, shape index: {}]
  %s5 = inlined_call_operand.hbm [shape: f32[2,16,128], index: 5, kind: output, shape index: {}]
  %s6 = sld [smem:[#allocation0]]
  $region65: #{tpu_custom_call.1} parent=0
    _
  %s8 = ssub.s32 1, %s6
  %s9 = scalar_select 0, %s8, %s6
  $region1: #{tpu_custom_call.1} parent=0
    #allocation2 [shape = 'u8[16384]{0}', space=vmem, size = 0x4000, scoped, tag = 'input window, operand 0']
    #allocation3 [shape = 's32[2]{0}', space=sflag, size = 0x8, scoped, tag = 'scoped memory for tpu_custom_call.1']
    #allocation4 [shape = 's32[2]{0}', space=sflag, size = 0x8, scoped, tag = 'scoped memory for tpu_custom_call.1']
    #allocation5 [shape = 'u8[98304]{0}', space=vmem, size = 0x18000, scoped, tag = 'input window, operand 1, single buffered']
    #allocation6 [shape = 's32[1]{0}', space=sflag, size = 0x4, scoped, tag = 'scoped memory for tpu_custom_call.1']
    #allocation7 [shape = 'u8[196608]{0}', space=vmem, size = 0x30000, scoped, tag = 'input window, operand 3, single buffered']
    #allocation8 [shape = 'u8[16384]{0}', space=vmem, size = 0x4000, scoped, tag = 'output window, operand 0']
    %10 = vsyncpa [#allocation3], 0
    %s11 = scalar_lea.sflag [#allocation3], 1
    %12 = vsyncpa %s11, 0
    %13 = vsyncpa [#allocation6], 0
    %14 = vsyncpa [#allocation4], 0
    %s15 = scalar_lea.sflag [#allocation4], 1
    %16 = vsyncpa %s15, 0
    loop: start=0, step=1, limit=4
    $region2: #{tpu_custom_call.1} parent=1 // loop_pre_header
      _
    $region3: #{tpu_custom_call.1} parent=1 // loop_header
      %s18 = sphi 0, %s22
      %p19 = scmp.ge.s32.totalorder %s18, 4
      %s28 = sphi 0, %s30
      %s31 = sphi 0, %s28
      %s32 = sphi 0, %s31
      %s48 = sphi 0, %s32
      %s52 = sphi 0, %s52
      %s54 = sphi 0, %s52
      %s55 = sphi 0, %s54
      %s69 = sphi 0, %s55
      %s73 = sphi 0, %s73
      %s75 = sphi 0, %s73
      %s76 = sphi 0, %s75
      %s90 = sphi 0, %s76
      %s94 = sphi 0, %s94
      %s96 = sphi 0, %s94
      %s97 = sphi 0, %s96
      %s111 = sphi 0, %s97
      %s115 = sphi 0, %s115
      %s117 = sphi 0, %s115
      %s118 = sphi 0, %s117
      %s132 = sphi 0, %s118
      %s138 = sphi 0, %s140
      %s141 = sphi 0, %s138
      %s142 = sphi 0, %s141
      %s158 = sphi 0, %s142
    $region4: #{tpu_custom_call.1} parent=1 // loop_header_branch
      %21 = sbr.rel (%p19) target = $region8
    $region5: #{tpu_custom_call.1} parent=1 // loop_body
      %s23 = ssub.s32 %s18, 1
      %s24 = ssub.s32 %s18, 2
      %s25 = sadd.s32 %s18, 1
      %s26 = ssub.s32 %s18, %s25
      %p27 = scmp.eq.s32.totalorder %s26, 0
      %s29 = sadd.s32 %s28, 1
      %s30 = scalar_select %p27, %s28, %s29
      %p33 = pneg %p27
      %p34 = scmp.eq.s32.totalorder %s18, 1
      %p35 = por %p33, %p34
      %p36 = scmp.ne.s32.totalorder %s28, %s31
      %p37 = scmp.eq.s32.totalorder %s18, 0
      %p38 = por %p36, %p37
      %p39 = scmp.ne.s32.totalorder %s28, %s31
      %p40 = scmp.eq.s32.totalorder %s23, 1
      %p41 = por %p39, %p40
      %p42 = scmp.ne.s32.totalorder %s31, %s32
      %p43 = scmp.eq.s32.totalorder %s23, 0
      %p44 = por %p42, %p43
      %p45 = scmp.ne.s32.totalorder %s31, %s32
      %p46 = scmp.eq.s32.totalorder %s24, 1
      %p47 = por %p45, %p46
      %p49 = scmp.ne.s32.totalorder %s32, %s48
      %p50 = scmp.eq.s32.totalorder %s24, 0
      %p51 = por %p49, %p50
      %s53 = sadd.s32 %s52, 1
      %p56 = scmp.eq.s32.totalorder %s18, 1
      %p57 = scmp.ne.s32.totalorder %s52, %s54
      %p58 = scmp.eq.s32.totalorder %s18, 0
      %p59 = por %p57, %p58
      %p60 = scmp.ne.s32.totalorder %s52, %s54
      %p61 = scmp.eq.s32.totalorder %s23, 1
      %p62 = por %p60, %p61
      %p63 = scmp.ne.s32.totalorder %s54, %s55
      %p64 = scmp.eq.s32.totalorder %s23, 0
      %p65 = por %p63, %p64
      %p66 = scmp.ne.s32.totalorder %s54, %s55
      %p67 = scmp.eq.s32.totalorder %s24, 1
      %p68 = por %p66, %p67
      %p70 = scmp.ne.s32.totalorder %s55, %s69
      %p71 = scmp.eq.s32.totalorder %s24, 0
      %p72 = por %p70, %p71
      %s74 = sadd.s32 %s73, 1
      %p77 = scmp.eq.s32.totalorder %s18, 1
      %p78 = scmp.ne.s32.totalorder %s73, %s75
      %p79 = scmp.eq.s32.totalorder %s18, 0
      %p80 = por %p78, %p79
      %p81 = scmp.ne.s32.totalorder %s73, %s75
      %p82 = scmp.eq.s32.totalorder %s23, 1
      %p83 = por %p81, %p82
      %p84 = scmp.ne.s32.totalorder %s75, %s76
      %p85 = scmp.eq.s32.totalorder %s23, 0
      %p86 = por %p84, %p85
      %p87 = scmp.ne.s32.totalorder %s75, %s76
      %p88 = scmp.eq.s32.totalorder %s24, 1
      %p89 = por %p87, %p88
      %p91 = scmp.ne.s32.totalorder %s76, %s90
      %p92 = scmp.eq.s32.totalorder %s24, 0
      %p93 = por %p91, %p92
      %s95 = sadd.s32 %s94, 1
      %p98 = scmp.eq.s32.totalorder %s18, 1
      %p99 = scmp.ne.s32.totalorder %s94, %s96
      %p100 = scmp.eq.s32.totalorder %s18, 0
      %p101 = por %p99, %p100
      %p102 = scmp.ne.s32.totalorder %s94, %s96
      %p103 = scmp.eq.s32.totalorder %s23, 1
      %p104 = por %p102, %p103
      %p105 = scmp.ne.s32.totalorder %s96, %s97
      %p106 = scmp.eq.s32.totalorder %s23, 0
      %p107 = por %p105, %p106
      %p108 = scmp.ne.s32.totalorder %s96, %s97
      %p109 = scmp.eq.s32.totalorder %s24, 1
      %p110 = por %p108, %p109
      %p112 = scmp.ne.s32.totalorder %s97, %s111
      %p113 = scmp.eq.s32.totalorder %s24, 0
      %p114 = por %p112, %p113
      %s116 = sadd.s32 %s115, 1
      %p119 = scmp.eq.s32.totalorder %s18, 1
      %p120 = scmp.ne.s32.totalorder %s115, %s117
      %p121 = scmp.eq.s32.totalorder %s18, 0
      %p122 = por %p120, %p121
      %p123 = scmp.ne.s32.totalorder %s115, %s117
      %p124 = scmp.eq.s32.totalorder %s23, 1
      %p125 = por %p123, %p124
      %p126 = scmp.ne.s32.totalorder %s117, %s118
      %p127 = scmp.eq.s32.totalorder %s23, 0
      %p128 = por %p126, %p127
      %p129 = scmp.ne.s32.totalorder %s117, %s118
      %p130 = scmp.eq.s32.totalorder %s24, 1
      %p131 = por %p129, %p130
      %p133 = scmp.ne.s32.totalorder %s118, %s132
      %p134 = scmp.eq.s32.totalorder %s24, 0
      %p135 = por %p133, %p134
      %s136 = ssub.s32 %s18, %s25
      %p137 = scmp.eq.s32.totalorder %s136, 0
      %s139 = sadd.s32 %s138, 1
      %s140 = scalar_select %p137, %s138, %s139
      %p143 = pneg %p137
      %p144 = scmp.eq.s32.totalorder %s18, 1
      %p145 = por %p143, %p144
      %p146 = scmp.ne.s32.totalorder %s138, %s141
      %p147 = scmp.eq.s32.totalorder %s18, 0
      %p148 = por %p146, %p147
      %p149 = scmp.ne.s32.totalorder %s138, %s141
      %p150 = scmp.eq.s32.totalorder %s23, 1
      %p151 = por %p149, %p150
      %p152 = scmp.ne.s32.totalorder %s141, %s142
      %p153 = scmp.eq.s32.totalorder %s23, 0
      %p154 = por %p152, %p153
      %p155 = scmp.ne.s32.totalorder %s141, %s142
      %p156 = scmp.eq.s32.totalorder %s24, 1
      %p157 = por %p155, %p156
      %p159 = scmp.ne.s32.totalorder %s142, %s158
      %p160 = scmp.eq.s32.totalorder %s24, 0
      %p161 = por %p159, %p160
      %p162 = scmp.le.s32.totalorder 1, %s18
      %p163 = scmp.lt.s32.totalorder %s18, 3
      %p164 = pnand %p162, %p163
      %p165 = pneg %p164
      // Predicated region
      $region9: #{tpu_custom_call.1} parent=5 // pred_check
        _
      $region10: #{tpu_custom_call.1} parent=5 // pred_check_branch
        %167 = sbr.rel (%p164) target = $region12
      $region11: #{tpu_custom_call.1} parent=5 // pred_region
        %s168 = ssub.s32 %s18, 1
        // Predicated region
        $region13: #{tpu_custom_call.1} parent=11 // pred_check
          %p169 = pneg %p65
        $region14: #{tpu_custom_call.1} parent=11 // pred_check_branch
          %171 = sbr.rel (%p169) target = $region16
        $region15: #{tpu_custom_call.1} parent=11 // pred_region
          %s173 = ssub.s32 3072, 3072
          %174 = vsyncadd [#allocation6], %s173
          %s175 = sshll.u32 [#allocation5], 4
          %s176 = int_to_ptr.vmem [resolvable:$true] %s175
          %181 = dma.hbm_to_vmem [thread:$0]  %s1, 3072, %s176, [#allocation6], 128, 128, 8
        $region16: #{tpu_custom_call.1} parent=11 // pred_fallthru
          _
        // Predicated region
        $region17: #{tpu_custom_call.1} parent=11 // pred_check
          %p182 = pneg %p86
        $region18: #{tpu_custom_call.1} parent=11 // pred_check_branch
          %184 = sbr.rel (%p182) target = $region20
        $region19: #{tpu_custom_call.1} parent=11 // pred_region
          _
        $region20: #{tpu_custom_call.1} parent=11 // pred_fallthru
          _
        // Predicated region
        $region21: #{tpu_custom_call.1} parent=11 // pred_check
          %p185 = pneg %p107
        $region22: #{tpu_custom_call.1} parent=11 // pred_check_branch
          %187 = sbr.rel (%p185) target = $region24
        $region23: #{tpu_custom_call.1} parent=11 // pred_region
          %s189 = ssub.s32 6144, 6144
          %190 = vsyncadd [#allocation6], %s189
          %s191 = sshll.u32 [#allocation7], 4
          %s192 = int_to_ptr.vmem [resolvable:$true] %s191
          %197 = dma.hbm_to_vmem [thread:$0]  %s3, 6144, %s192, [#allocation6], 128, 128, 8
        $region24: #{tpu_custom_call.1} parent=11 // pred_fallthru
          _
        // Predicated region
        $region25: #{tpu_custom_call.1} parent=11 // pred_check
          %p198 = pneg %p128
        $region26: #{tpu_custom_call.1} parent=11 // pred_check_branch
          %200 = sbr.rel (%p198) target = $region28
        $region27: #{tpu_custom_call.1} parent=11 // pred_region
          _
        $region28: #{tpu_custom_call.1} parent=11 // pred_fallthru
          _
      $region12: #{tpu_custom_call.1} parent=5 // pred_fallthru
        _
      %p201 = scmp.lt.s32.totalorder %s18, 2
      // Predicated region
      $region29: #{tpu_custom_call.1} parent=5 // pred_check
        %p202 = pneg %p201
      $region30: #{tpu_custom_call.1} parent=5 // pred_check_branch
        %204 = sbr.rel (%p202) target = $region32
      $region31: #{tpu_custom_call.1} parent=5 // pred_region
        // Predicated region
        $region33: #{tpu_custom_call.1} parent=31 // pred_check
          %p205 = pneg %p38
        $region34: #{tpu_custom_call.1} parent=31 // pred_check_branch
          %207 = sbr.rel (%p205) target = $region36
        $region35: #{tpu_custom_call.1} parent=31 // pred_region
          %s208 = sand.u32 %s28, 1
          %s209 = scalar_lea.sflag [#allocation3], %s208
          %s210 = sand.u32 %s28, 1
          %s211 = smul.addr %s210, 16
          %s212 = scalar_lea.vmem [#allocation2], %s211
          %s214 = ssub.s32 256, 256
          %215 = vsyncadd %s209, %s214
          %s216 = smul.addr %s18, 2
          %s217 = smul.addr %s216, 128
          %s218 = scalar_lea.hbm %s0, %s217
          %s219 = sshll.u32 %s212, 4
          %s220 = int_to_ptr.vmem [resolvable:$true] %s219
          %225 = dma.hbm_to_vmem [thread:$0]  %s218, 256, %s220, %s209, 128, 128, 8
        $region36: #{tpu_custom_call.1} parent=31 // pred_fallthru
          _
      $region32: #{tpu_custom_call.1} parent=5 // pred_fallthru
        _
      %p226 = scmp.le.s32.totalorder 1, %s18
      %p227 = scmp.lt.s32.totalorder %s18, 3
      %p228 = pnand %p226, %p227
      %p229 = pneg %p228
      // Predicated region
      $region37: #{tpu_custom_call.1} parent=5 // pred_check
        _
      $region38: #{tpu_custom_call.1} parent=5 // pred_check_branch
        %231 = sbr.rel (%p228) target = $region40
      $region39: #{tpu_custom_call.1} parent=5 // pred_region
        %s232 = ssub.s32 %s18, 1
        %s233 = sand.u32 %s31, 1
        %s234 = scalar_lea.sflag [#allocation3], %s233
        %s235 = sand.u32 %s31, 1
        %s236 = smul.addr %s235, 16
        %s237 = scalar_lea.vmem [#allocation2], %s236
        // Predicated region
        $region41: #{tpu_custom_call.1} parent=39 // pred_check
          %p238 = pneg %p44
        $region42: #{tpu_custom_call.1} parent=39 // pred_check_branch
          %240 = sbr.rel (%p238) target = $region44
        $region43: #{tpu_custom_call.1} parent=39 // pred_region
          %241 = dma.done %s234, 256
        $region44: #{tpu_custom_call.1} parent=39 // pred_fallthru
          _
        // Predicated region
        $region45: #{tpu_custom_call.1} parent=39 // pred_check
          %p242 = pneg %p65
        $region46: #{tpu_custom_call.1} parent=39 // pred_check_branch
          %244 = sbr.rel (%p242) target = $region48
        $region47: #{tpu_custom_call.1} parent=39 // pred_region
          %245 = dma.done [#allocation6], 3072
        $region48: #{tpu_custom_call.1} parent=39 // pred_fallthru
          _
        // Predicated region
        $region49: #{tpu_custom_call.1} parent=39 // pred_check
          %p246 = pneg %p107
        $region50: #{tpu_custom_call.1} parent=39 // pred_check_branch
          %248 = sbr.rel (%p246) target = $region52
        $region51: #{tpu_custom_call.1} parent=39 // pred_region
          %249 = dma.done [#allocation6], 6144
        $region52: #{tpu_custom_call.1} parent=39 // pred_fallthru
          _
        %s250 = sand.u32 %s31, 1
        %s251 = scalar_lea.sflag [#allocation3], %s250
        %s252 = sand.u32 %s31, 1
        %s253 = smul.addr %s252, 16
        %s254 = scalar_lea.vmem [#allocation2], %s253
        %p255 = pneg %p44
        %p256 = pneg %p41
        %p257 = pneg %p65
        %p258 = pneg %p62
        %p259 = pneg %p86
        %p260 = pneg %p83
        %p261 = pneg %p107
        %p262 = pneg %p104
        %p263 = pneg %p128
        %p264 = pneg %p125
        %p265 = pneg %p154
        %p266 = pneg %p151
        %s267 = sand.u32 %s141, 1
        %s268 = scalar_lea.sflag [#allocation4], %s267
        %s269 = sand.u32 %s141, 1
        %s270 = smul.addr %s269, 16
        %s271 = scalar_lea.vmem [#allocation8], %s270
        %v272 = vld [vmem:[%s237] sm:$0xff]
        %v273 = vld [vmem:[%s237 + $0x8] sm:$0xff]
        %v274 = vlaneseq
        %v275 = vshrl.u32 %v274, 7
        %v276 = vadd.s32 %v275, 8
        %vm277 = vcmp.lt.s32.totalorder %v275, 0
        %v278 = vsub.s32 0, %v275
        %v279 = vsel %vm277, %v278, %v275
        %v280 = vshrl.u32 %v279, 4
        %v281 = vand.u32 %v279, 15
        %v282 = vsub.s32 0, %v281
        %v283 = vsel %vm277, %v282, %v281
        %vm284 = vcmp.lt.s32.totalorder %v276, 0
        %v285 = vsub.s32 0, %v276
        %v286 = vsel %vm284, %v285, %v276
        %v287 = vshrl.u32 %v286, 4
        %v288 = vand.u32 %v286, 15
        %v289 = vsub.s32 0, %v288
        %v290 = vsel %vm284, %v289, %v288
        %vm291 = vcmp.ne.s32.totalorder %v283, 0
        %vm292 = vcmp.ne.s32.totalorder %v290, 0
        %vm293 = vcmp.lt.s32.totalorder %v283, 0
        %vm294 = vcmp.lt.s32.totalorder %v290, 0
        %vm295 = vmand %vm293, %vm291
        %vm296 = vmand %vm294, %vm292
        %v297 = vadd.s32 %v283, 16
        %v298 = vadd.s32 %v290, 16
        %v299 = vsel %vm295, %v297, %v283
        %v300 = vsel %vm296, %v298, %v290
        %vm301 = vcmp.eq.s32.totalorder %v299, 0
        %vm302 = vcmp.eq.s32.totalorder %v300, 0
        %vm303 = vcmp.eq.s32.totalorder %v299, 15
        %vm304 = vcmp.eq.s32.totalorder %v300, 15
        %v305 = vrot.slane %v272, 7
        %v306 = vrot.slane %v273, 7
        %vm307 = vcmp.lt.s32.totalorder %v275, 1
        %v308 = vsel %vm307, %v305, %v306
        %v309 = vsel %vm307, %v306, %v305
        %v310 = vsel %vm301, 1, 0
        %v311 = vsel %vm302, 1, 0
        %vm312 = vcmp.eq.s32.totalorder %v310, 1
        %vm313 = vcmp.eq.s32.totalorder %v311, 1
        %v314 = vsel %vm312, 0.0, %v309
        %v315 = vsel %vm313, 0.0, %v308
        %v316 = vld [vmem:[#allocation5] sm:$0xff]
        %v317 = vld [vmem:[#allocation5 + $0x8] sm:$0xff]
        %v318 = vld [vmem:[#allocation5 + $0x10] sm:$0xff]
        %v319 = vld [vmem:[#allocation5 + $0x18] sm:$0xff]
        %v320 = vld [vmem:[#allocation5 + $0x20] sm:$0xff]
        %v321 = vld [vmem:[#allocation5 + $0x28] sm:$0xff]
        %v322 = vld [vmem:[#allocation5 + $0x30] sm:$0xff]
        %v323 = vld [vmem:[#allocation5 + $0x38] sm:$0xff]
        %v324 = vld [vmem:[%s2] sm:$0x1]
        %v326 = vlaneseq
        %v327 = vshrl.u32 %v326, 7
        %v328 = vsub.s32 0, %v327
        %v329 = vrot.slane %v324, %v328
        %vm331 = vcmask 523264
        %v333 = vsel %vm331, %v314, 0
        %v336 = vsel %vm331, %v315, 0
        %338 = vmatprep.subr.mxu0 0.0
        %339 = vmatpush1.msra.mxu0 %v316
        %340 = vmatprep.subr.mxu0 0.0
        %341 = vmatpush1.msra.mxu0 %v317
        %342 = vmatprep.subr.mxu0 0.0
        %343 = vmatpush1.msra.mxu0 %v318
        %344 = vmatprep.subr.mxu0 0.0
        %345 = vmatpush1.msra.mxu0 %v319
        %346 = vmatprep.subr.mxu0 0.0
        %347 = vmatpush1.msra.mxu0 %v320
        %348 = vmatprep.subr.mxu0 0.0
        %349 = vmatpush1.msra.mxu0 %v321
        %350 = vmatprep.subr.mxu0 0.0
        %351 = vmatpush1.msra.mxu0 %v322
        %352 = vmatprep.subr.mxu0 0.0
        %353 = vmatpush1.msra.mxu0 %v323
        %354 = vmatprep.subr.mxu0 0.0
        %355 = vmatpush1.msra.mxu0 0.0
        %356 = vmatprep.subr.mxu0 0.0
        %357 = vmatpush1.msra.mxu0 0.0
        %358 = vmatprep.subr.mxu0 0.0
        %359 = vmatpush1.msra.mxu0 0.0
        %360 = vmatprep.subr.mxu0 0.0
        %361 = vmatpush1.msra.mxu0 0.0
        %362 = vmatprep.subr.mxu0 0.0
        %363 = vmatpush1.msra.mxu0 0.0
        %364 = vmatprep.subr.mxu0 0.0
        %365 = vmatpush1.msra.mxu0 0.0
        %366 = vmatprep.subr.mxu0 0.0
        %367 = vmatpush1.msra.mxu0 0.0
        %368 = vmatprep.subr.mxu0 0.0
        %369 = vmatpush1.msra.mxu0 0.0
        %370 = vmatprep.subr.mxu0 0.0
        %371 = vmatpush1.msra.mxu0 0.0
        %372 = vmatprep.subr.mxu0 0.0
        %373 = vmatpush1.msra.mxu0 0.0
        %374 = vmatprep.subr.mxu0 0.0
        %375 = vmatpush1.msra.mxu0 0.0
        %376 = vmatprep.subr.mxu0 0.0
        %377 = vmatpush1.msra.mxu0 0.0
        %378 = vmatprep.subr.mxu0 0.0
        %379 = vmatpush1.msra.mxu0 0.0
        %380 = vmatprep.subr.mxu0 0.0
        %381 = vmatpush1.msra.mxu0 0.0
        %382 = vmatprep.subr.mxu0 0.0
        %383 = vmatpush1.msra.mxu0 0.0
        %384 = vmatprep.subr.mxu0 0.0
        %385 = vmatpush1.msra.mxu0 0.0
        %386 = vmatprep.subr.mxu0 0.0
        %387 = vmatpush1.msra.mxu0 0.0
        %388 = vmatprep.subr.mxu0 0.0
        %389 = vmatpush1.msra.mxu0 0.0
        %390 = vmatprep.subr.mxu0 0.0
        %391 = vmatpush1.msra.mxu0 0.0
        %392 = vmatprep.subr.mxu0 0.0
        %393 = vmatpush1.msra.mxu0 0.0
        %394 = vmatprep.subr.mxu0 0.0
        %395 = vmatpush1.msra.mxu0 0.0
        %396 = vmatprep.subr.mxu0 0.0
        %397 = vmatpush1.msra.mxu0 0.0
        %398 = vmatprep.subr.mxu0 0.0
        %399 = vmatpush1.msra.mxu0 0.0
        %400 = vmatprep.subr.mxu0 0.0
        %401 = vmatpush1.msra.mxu0 0.0
        %402 = vmatprep.mubr.f32.mxu0 0.0
        %403 = vmatmul.mubr.f32.gmra.mrb[0].mxu0 %v333
        %v404 = vpop.f32.mrb[0].mxu0
        %v405 = vadd.f32 %v329, %v404
        %v406 = vpop.f32.mrb[0].mxu0
        %407 = vmatprep.mubr.f32.mxu0 0.0
        %408 = vmatmul.mubr.f32.gmra.mrb[0].mxu0 %v336
        %v409 = vpop.f32.mrb[0].mxu0
        %v410 = vadd.f32 %v329, %v409
        %v411 = vpop.f32.mrb[0].mxu0
        %412 = vdwg.mxu0
        %s413 = scalar_lea.vmem [#allocation5], 64
        %v414 = vld [vmem:[%s413] sm:$0xff]
        %v415 = vld [vmem:[%s413 + $0x8] sm:$0xff]
        %v416 = vld [vmem:[%s413 + $0x10] sm:$0xff]
        %v417 = vld [vmem:[%s413 + $0x18] sm:$0xff]
        %v418 = vld [vmem:[%s413 + $0x20] sm:$0xff]
        %v419 = vld [vmem:[%s413 + $0x28] sm:$0xff]
        %v420 = vld [vmem:[%s413 + $0x30] sm:$0xff]
        %v421 = vld [vmem:[%s413 + $0x38] sm:$0xff]
        %v423 = vsel %vm331, %v272, 0
        %v426 = vsel %vm331, %v273, 0
        %428 = vmatprep.subr.mxu0 0.0
        %429 = vmatpush1.msra.mxu0 %v414
        %430 = vmatprep.subr.mxu0 0.0
        %431 = vmatpush1.msra.mxu0 %v415
        %432 = vmatprep.subr.mxu0 0.0
        %433 = vmatpush1.msra.mxu0 %v416
        %434 = vmatprep.subr.mxu0 0.0
        %435 = vmatpush1.msra.mxu0 %v417
        %436 = vmatprep.subr.mxu0 0.0
        %437 = vmatpush1.msra.mxu0 %v418
        %438 = vmatprep.subr.mxu0 0.0
        %439 = vmatpush1.msra.mxu0 %v419
        %440 = vmatprep.subr.mxu0 0.0
        %441 = vmatpush1.msra.mxu0 %v420
        %442 = vmatprep.subr.mxu0 0.0
        %443 = vmatpush1.msra.mxu0 %v421
        %444 = vmatprep.subr.mxu0 0.0
        %445 = vmatpush1.msra.mxu0 0.0
        %446 = vmatprep.subr.mxu0 0.0
        %447 = vmatpush1.msra.mxu0 0.0
        %448 = vmatprep.subr.mxu0 0.0
        %449 = vmatpush1.msra.mxu0 0.0
        %450 = vmatprep.subr.mxu0 0.0
        %451 = vmatpush1.msra.mxu0 0.0
        %452 = vmatprep.subr.mxu0 0.0
        %453 = vmatpush1.msra.mxu0 0.0
        %454 = vmatprep.subr.mxu0 0.0
        %455 = vmatpush1.msra.mxu0 0.0
        %456 = vmatprep.subr.mxu0 0.0
        %457 = vmatpush1.msra.mxu0 0.0
        %458 = vmatprep.subr.mxu0 0.0
        %459 = vmatpush1.msra.mxu0 0.0
        %460 = vmatprep.subr.mxu0 0.0
        %461 = vmatpush1.msra.mxu0 0.0
        %462 = vmatprep.subr.mxu0 0.0
        %463 = vmatpush1.msra.mxu0 0.0
        %464 = vmatprep.subr.mxu0 0.0
        %465 = vmatpush1.msra.mxu0 0.0
        %466 = vmatprep.subr.mxu0 0.0
        %467 = vmatpush1.msra.mxu0 0.0
        %468 = vmatprep.subr.mxu0 0.0
        %469 = vmatpush1.msra.mxu0 0.0
        %470 = vmatprep.subr.mxu0 0.0
        %471 = vmatpush1.msra.mxu0 0.0
        %472 = vmatprep.subr.mxu0 0.0
        %473 = vmatpush1.msra.mxu0 0.0
        %474 = vmatprep.subr.mxu0 0.0
        %475 = vmatpush1.msra.mxu0 0.0
        %476 = vmatprep.subr.mxu0 0.0
        %477 = vmatpush1.msra.mxu0 0.0
        %478 = vmatprep.subr.mxu0 0.0
        %479 = vmatpush1.msra.mxu0 0.0
        %480 = vmatprep.subr.mxu0 0.0
        %481 = vmatpush1.msra.mxu0 0.0
        %482 = vmatprep.subr.mxu0 0.0
        %483 = vmatpush1.msra.mxu0 0.0
        %484 = vmatprep.subr.mxu0 0.0
        %485 = vmatpush1.msra.mxu0 0.0
        %486 = vmatprep.subr.mxu0 0.0
        %487 = vmatpush1.msra.mxu0 0.0
        %488 = vmatprep.subr.mxu0 0.0
        %489 = vmatpush1.msra.mxu0 0.0
        %490 = vmatprep.subr.mxu0 0.0
        %491 = vmatpush1.msra.mxu0 0.0
        %492 = vmatprep.mubr.f32.mxu0 0.0
        %493 = vmatmul.mubr.f32.gmra.mrb[0].mxu0 %v423
        %v494 = vpop.f32.mrb[0].mxu0
        %v495 = vadd.f32 0.0, %v494
        %v496 = vpop.f32.mrb[0].mxu0
        %497 = vmatprep.mubr.f32.mxu0 0.0
        %498 = vmatmul.mubr.f32.gmra.mrb[0].mxu0 %v426
        %v499 = vpop.f32.mrb[0].mxu0
        %v500 = vadd.f32 0.0, %v499
        %v501 = vpop.f32.mrb[0].mxu0
        %502 = vdwg.mxu0
        %v503 = vadd.f32 %v405, %v495
        %v504 = vadd.f32 %v410, %v500
        %v505 = vrot.slane %v272, 1
        %v506 = vrot.slane %v273, 1
        %vm507 = vcmp.lt.s32.totalorder %v275, 7
        %v508 = vsel %vm507, %v505, %v506
        %v509 = vsel %vm507, %v506, %v505
        %v510 = vsel %vm303, 1, 0
        %v511 = vsel %vm304, 1, 0
        %vm512 = vcmp.eq.s32.totalorder %v510, 1
        %vm513 = vcmp.eq.s32.totalorder %v511, 1
        %v514 = vsel %vm512, 0.0, %v508
        %v515 = vsel %vm513, 0.0, %v509
        %s516 = scalar_lea.vmem [#allocation5], 128
        %v517 = vld [vmem:[%s516] sm:$0xff]
        %v518 = vld [vmem:[%s516 + $0x8] sm:$0xff]
        %v519 = vld [vmem:[%s516 + $0x10] sm:$0xff]
        %v520 = vld [vmem:[%s516 + $0x18] sm:$0xff]
        %v521 = vld [vmem:[%s516 + $0x20] sm:$0xff]
        %v522 = vld [vmem:[%s516 + $0x28] sm:$0xff]
        %v523 = vld [vmem:[%s516 + $0x30] sm:$0xff]
        %v524 = vld [vmem:[%s516 + $0x38] sm:$0xff]
        %v526 = vsel %vm331, %v514, 0
        %v529 = vsel %vm331, %v515, 0
        %531 = vmatprep.subr.mxu0 0.0
        %532 = vmatpush1.msra.mxu0 %v517
        %533 = vmatprep.subr.mxu0 0.0
        %534 = vmatpush1.msra.mxu0 %v518
        %535 = vmatprep.subr.mxu0 0.0
        %536 = vmatpush1.msra.mxu0 %v519
        %537 = vmatprep.subr.mxu0 0.0
        %538 = vmatpush1.msra.mxu0 %v520
        %539 = vmatprep.subr.mxu0 0.0
        %540 = vmatpush1.msra.mxu0 %v521
        %541 = vmatprep.subr.mxu0 0.0
        %542 = vmatpush1.msra.mxu0 %v522
        %543 = vmatprep.subr.mxu0 0.0
        %544 = vmatpush1.msra.mxu0 %v523
        %545 = vmatprep.subr.mxu0 0.0
        %546 = vmatpush1.msra.mxu0 %v524
        %547 = vmatprep.subr.mxu0 0.0
        %548 = vmatpush1.msra.mxu0 0.0
        %549 = vmatprep.subr.mxu0 0.0
        %550 = vmatpush1.msra.mxu0 0.0
        %551 = vmatprep.subr.mxu0 0.0
        %552 = vmatpush1.msra.mxu0 0.0
        %553 = vmatprep.subr.mxu0 0.0
        %554 = vmatpush1.msra.mxu0 0.0
        %555 = vmatprep.subr.mxu0 0.0
        %556 = vmatpush1.msra.mxu0 0.0
        %557 = vmatprep.subr.mxu0 0.0
        %558 = vmatpush1.msra.mxu0 0.0
        %559 = vmatprep.subr.mxu0 0.0
        %560 = vmatpush1.msra.mxu0 0.0
        %561 = vmatprep.subr.mxu0 0.0
        %562 = vmatpush1.msra.mxu0 0.0
        %563 = vmatprep.subr.mxu0 0.0
        %564 = vmatpush1.msra.mxu0 0.0
        %565 = vmatprep.subr.mxu0 0.0
        %566 = vmatpush1.msra.mxu0 0.0
        %567 = vmatprep.subr.mxu0 0.0
        %568 = vmatpush1.msra.mxu0 0.0
        %569 = vmatprep.subr.mxu0 0.0
        %570 = vmatpush1.msra.mxu0 0.0
        %571 = vmatprep.subr.mxu0 0.0
        %572 = vmatpush1.msra.mxu0 0.0
        %573 = vmatprep.subr.mxu0 0.0
        %574 = vmatpush1.msra.mxu0 0.0
        %575 = vmatprep.subr.mxu0 0.0
        %576 = vmatpush1.msra.mxu0 0.0
        %577 = vmatprep.subr.mxu0 0.0
        %578 = vmatpush1.msra.mxu0 0.0
        %579 = vmatprep.subr.mxu0 0.0
        %580 = vmatpush1.msra.mxu0 0.0
        %581 = vmatprep.subr.mxu0 0.0
        %582 = vmatpush1.msra.mxu0 0.0
        %583 = vmatprep.subr.mxu0 0.0
        %584 = vmatpush1.msra.mxu0 0.0
        %585 = vmatprep.subr.mxu0 0.0
        %586 = vmatpush1.msra.mxu0 0.0
        %587 = vmatprep.subr.mxu0 0.0
        %588 = vmatpush1.msra.mxu0 0.0
        %589 = vmatprep.subr.mxu0 0.0
        %590 = vmatpush1.msra.mxu0 0.0
        %591 = vmatprep.subr.mxu0 0.0
        %592 = vmatpush1.msra.mxu0 0.0
        %593 = vmatprep.subr.mxu0 0.0
        %594 = vmatpush1.msra.mxu0 0.0
        %595 = vmatprep.mubr.f32.mxu0 0.0
        %596 = vmatmul.mubr.f32.gmra.mrb[0].mxu0 %v526
        %v597 = vpop.f32.mrb[0].mxu0
        %v598 = vadd.f32 0.0, %v597
        %v599 = vpop.f32.mrb[0].mxu0
        %600 = vmatprep.mubr.f32.mxu0 0.0
        %601 = vmatmul.mubr.f32.gmra.mrb[0].mxu0 %v529
        %v602 = vpop.f32.mrb[0].mxu0
        %v603 = vadd.f32 0.0, %v602
        %v604 = vpop.f32.mrb[0].mxu0
        %605 = vdwg.mxu0
        %v606 = vadd.f32 %v503, %v598
        %v607 = vadd.f32 %v504, %v603
        %v608 = vrot.slane %v606, 7
        %v609 = vrot.slane %v607, 7
        %v610 = vsel %vm307, %v608, %v609
        %v611 = vsel %vm307, %v609, %v608
        %v612 = vsel %vm312, 0.0, %v611
        %v613 = vsel %vm313, 0.0, %v610
        %v614 = vld [vmem:[#allocation7] sm:$0xff]
        %v615 = vld [vmem:[#allocation7 + $0x8] sm:$0xff]
        %v616 = vld [vmem:[#allocation7 + $0x10] sm:$0xff]
        %v617 = vld [vmem:[#allocation7 + $0x18] sm:$0xff]
        %v618 = vld [vmem:[#allocation7 + $0x20] sm:$0xff]
        %v619 = vld [vmem:[#allocation7 + $0x28] sm:$0xff]
        %v620 = vld [vmem:[#allocation7 + $0x30] sm:$0xff]
        %v621 = vld [vmem:[#allocation7 + $0x38] sm:$0xff]
        %v622 = vld [vmem:[#allocation7 + $0x40] sm:$0xff]
        %v623 = vld [vmem:[#allocation7 + $0x48] sm:$0xff]
        %v624 = vld [vmem:[#allocation7 + $0x50] sm:$0xff]
        %v625 = vld [vmem:[#allocation7 + $0x58] sm:$0xff]
        %v626 = vld [vmem:[#allocation7 + $0x60] sm:$0xff]
        %v627 = vld [vmem:[#allocation7 + $0x68] sm:$0xff]
        %v628 = vld [vmem:[#allocation7 + $0x70] sm:$0xff]
        %v629 = vld [vmem:[#allocation7 + $0x78] sm:$0xff]
        %v630 = vld [vmem:[%s4] sm:$0x1]
        %v632 = vlaneseq
        %v633 = vshrl.u32 %v632, 7
        %v634 = vsub.s32 0, %v633
        %v635 = vrot.slane %v630, %v634
        %637 = vmatprep.subr.mxu0 0.0
        %638 = vmatpush1.msra.mxu0 %v614
        %639 = vmatprep.subr.mxu0 0.0
        %640 = vmatpush1.msra.mxu0 %v615
        %641 = vmatprep.subr.mxu0 0.0
        %642 = vmatpush1.msra.mxu0 %v616
        %643 = vmatprep.subr.mxu0 0.0
        %644 = vmatpush1.msra.mxu0 %v617
        %645 = vmatprep.subr.mxu0 0.0
        %646 = vmatpush1.msra.mxu0 %v618
        %647 = vmatprep.subr.mxu0 0.0
        %648 = vmatpush1.msra.mxu0 %v619
        %649 = vmatprep.subr.mxu0 0.0
        %650 = vmatpush1.msra.mxu0 %v620
        %651 = vmatprep.subr.mxu0 0.0
        %652 = vmatpush1.msra.mxu0 %v621
        %653 = vmatprep.subr.mxu0 0.0
        %654 = vmatpush1.msra.mxu0 %v622
        %655 = vmatprep.subr.mxu0 0.0
        %656 = vmatpush1.msra.mxu0 %v623
        %657 = vmatprep.subr.mxu0 0.0
        %658 = vmatpush1.msra.mxu0 %v624
        %659 = vmatprep.subr.mxu0 0.0
        %660 = vmatpush1.msra.mxu0 %v625
        %661 = vmatprep.subr.mxu0 0.0
        %662 = vmatpush1.msra.mxu0 %v626
        %663 = vmatprep.subr.mxu0 0.0
        %664 = vmatpush1.msra.mxu0 %v627
        %665 = vmatprep.subr.mxu0 0.0
        %666 = vmatpush1.msra.mxu0 %v628
        %667 = vmatprep.subr.mxu0 0.0
        %668 = vmatpush1.msra.mxu0 %v629
        %669 = vmatprep.subr.mxu0 0.0
        %670 = vmatpush1.msra.mxu0 0.0
        %671 = vmatprep.subr.mxu0 0.0
        %672 = vmatpush1.msra.mxu0 0.0
        %673 = vmatprep.subr.mxu0 0.0
        %674 = vmatpush1.msra.mxu0 0.0
        %675 = vmatprep.subr.mxu0 0.0
        %676 = vmatpush1.msra.mxu0 0.0
        %677 = vmatprep.subr.mxu0 0.0
        %678 = vmatpush1.msra.mxu0 0.0
        %679 = vmatprep.subr.mxu0 0.0
        %680 = vmatpush1.msra.mxu0 0.0
        %681 = vmatprep.subr.mxu0 0.0
        %682 = vmatpush1.msra.mxu0 0.0
        %683 = vmatprep.subr.mxu0 0.0
        %684 = vmatpush1.msra.mxu0 0.0
        %685 = vmatprep.subr.mxu0 0.0
        %686 = vmatpush1.msra.mxu0 0.0
        %687 = vmatprep.subr.mxu0 0.0
        %688 = vmatpush1.msra.mxu0 0.0
        %689 = vmatprep.subr.mxu0 0.0
        %690 = vmatpush1.msra.mxu0 0.0
        %691 = vmatprep.subr.mxu0 0.0
        %692 = vmatpush1.msra.mxu0 0.0
        %693 = vmatprep.subr.mxu0 0.0
        %694 = vmatpush1.msra.mxu0 0.0
        %695 = vmatprep.subr.mxu0 0.0
        %696 = vmatpush1.msra.mxu0 0.0
        %697 = vmatprep.subr.mxu0 0.0
        %698 = vmatpush1.msra.mxu0 0.0
        %699 = vmatprep.subr.mxu0 0.0
        %700 = vmatpush1.msra.mxu0 0.0
        %701 = vmatprep.mubr.f32.mxu0 0.0
        %702 = vmatmul.mubr.f32.gmra.mrb[0].mxu0 %v612
        %v703 = vpop.f32.mrb[0].mxu0
        %v704 = vadd.f32 %v635, %v703
        %v705 = vpop.f32.mrb[0].mxu0
        %706 = vmatprep.mubr.f32.mxu0 0.0
        %707 = vmatmul.mubr.f32.gmra.mrb[0].mxu0 %v613
        %v708 = vpop.f32.mrb[0].mxu0
        %v709 = vadd.f32 %v635, %v708
        %v710 = vpop.f32.mrb[0].mxu0
        %711 = vdwg.mxu0
        %s712 = scalar_lea.vmem [#allocation7], 128
        %v713 = vld [vmem:[%s712] sm:$0xff]
        %v714 = vld [vmem:[%s712 + $0x8] sm:$0xff]
        %v715 = vld [vmem:[%s712 + $0x10] sm:$0xff]
        %v716 = vld [vmem:[%s712 + $0x18] sm:$0xff]
        %v717 = vld [vmem:[%s712 + $0x20] sm:$0xff]
        %v718 = vld [vmem:[%s712 + $0x28] sm:$0xff]
        %v719 = vld [vmem:[%s712 + $0x30] sm:$0xff]
        %v720 = vld [vmem:[%s712 + $0x38] sm:$0xff]
        %v721 = vld [vmem:[%s712 + $0x40] sm:$0xff]
        %v722 = vld [vmem:[%s712 + $0x48] sm:$0xff]
        %v723 = vld [vmem:[%s712 + $0x50] sm:$0xff]
        %v724 = vld [vmem:[%s712 + $0x58] sm:$0xff]
        %v725 = vld [vmem:[%s712 + $0x60] sm:$0xff]
        %v726 = vld [vmem:[%s712 + $0x68] sm:$0xff]
        %v727 = vld [vmem:[%s712 + $0x70] sm:$0xff]
        %v728 = vld [vmem:[%s712 + $0x78] sm:$0xff]
        %729 = vmatprep.subr.mxu0 0.0
        %730 = vmatpush1.msra.mxu0 %v713
        %731 = vmatprep.subr.mxu0 0.0
        %732 = vmatpush1.msra.mxu0 %v714
        %733 = vmatprep.subr.mxu0 0.0
        %734 = vmatpush1.msra.mxu0 %v715
        %735 = vmatprep.subr.mxu0 0.0
        %736 = vmatpush1.msra.mxu0 %v716
        %737 = vmatprep.subr.mxu0 0.0
        %738 = vmatpush1.msra.mxu0 %v717
        %739 = vmatprep.subr.mxu0 0.0
        %740 = vmatpush1.msra.mxu0 %v718
        %741 = vmatprep.subr.mxu0 0.0
        %742 = vmatpush1.msra.mxu0 %v719
        %743 = vmatprep.subr.mxu0 0.0
        %744 = vmatpush1.msra.mxu0 %v720
        %745 = vmatprep.subr.mxu0 0.0
        %746 = vmatpush1.msra.mxu0 %v721
        %747 = vmatprep.subr.mxu0 0.0
        %748 = vmatpush1.msra.mxu0 %v722
        %749 = vmatprep.subr.mxu0 0.0
        %750 = vmatpush1.msra.mxu0 %v723
        %751 = vmatprep.subr.mxu0 0.0
        %752 = vmatpush1.msra.mxu0 %v724
        %753 = vmatprep.subr.mxu0 0.0
        %754 = vmatpush1.msra.mxu0 %v725
        %755 = vmatprep.subr.mxu0 0.0
        %756 = vmatpush1.msra.mxu0 %v726
        %757 = vmatprep.subr.mxu0 0.0
        %758 = vmatpush1.msra.mxu0 %v727
        %759 = vmatprep.subr.mxu0 0.0
        %760 = vmatpush1.msra.mxu0 %v728
        %761 = vmatprep.subr.mxu0 0.0
        %762 = vmatpush1.msra.mxu0 0.0
        %763 = vmatprep.subr.mxu0 0.0
        %764 = vmatpush1.msra.mxu0 0.0
        %765 = vmatprep.subr.mxu0 0.0
        %766 = vmatpush1.msra.mxu0 0.0
        %767 = vmatprep.subr.mxu0 0.0
        %768 = vmatpush1.msra.mxu0 0.0
        %769 = vmatprep.subr.mxu0 0.0
        %770 = vmatpush1.msra.mxu0 0.0
        %771 = vmatprep.subr.mxu0 0.0
        %772 = vmatpush1.msra.mxu0 0.0
        %773 = vmatprep.subr.mxu0 0.0
        %774 = vmatpush1.msra.mxu0 0.0
        %775 = vmatprep.subr.mxu0 0.0
        %776 = vmatpush1.msra.mxu0 0.0
        %777 = vmatprep.subr.mxu0 0.0
        %778 = vmatpush1.msra.mxu0 0.0
        %779 = vmatprep.subr.mxu0 0.0
        %780 = vmatpush1.msra.mxu0 0.0
        %781 = vmatprep.subr.mxu0 0.0
        %782 = vmatpush1.msra.mxu0 0.0
        %783 = vmatprep.subr.mxu0 0.0
        %784 = vmatpush1.msra.mxu0 0.0
        %785 = vmatprep.subr.mxu0 0.0
        %786 = vmatpush1.msra.mxu0 0.0
        %787 = vmatprep.subr.mxu0 0.0
        %788 = vmatpush1.msra.mxu0 0.0
        %789 = vmatprep.subr.mxu0 0.0
        %790 = vmatpush1.msra.mxu0 0.0
        %791 = vmatprep.subr.mxu0 0.0
        %792 = vmatpush1.msra.mxu0 0.0
        %793 = vmatprep.mubr.f32.mxu0 0.0
        %794 = vmatmul.mubr.f32.gmra.mrb[0].mxu0 %v606
        %v795 = vpop.f32.mrb[0].mxu0
        %v796 = vadd.f32 0.0, %v795
        %v797 = vpop.f32.mrb[0].mxu0
        %798 = vmatprep.mubr.f32.mxu0 0.0
        %799 = vmatmul.mubr.f32.gmra.mrb[0].mxu0 %v607
        %v800 = vpop.f32.mrb[0].mxu0
        %v801 = vadd.f32 0.0, %v800
        %v802 = vpop.f32.mrb[0].mxu0
        %803 = vdwg.mxu0
        %v804 = vadd.f32 %v704, %v796
        %v805 = vadd.f32 %v709, %v801
        %v806 = vrot.slane %v606, 1
        %v807 = vrot.slane %v607, 1
        %v808 = vsel %vm507, %v806, %v807
        %v809 = vsel %vm507, %v807, %v806
        %v810 = vsel %vm512, 0.0, %v808
        %v811 = vsel %vm513, 0.0, %v809
        %s812 = scalar_lea.vmem [#allocation7], 256
        %v813 = vld [vmem:[%s812] sm:$0xff]
        %v814 = vld [vmem:[%s812 + $0x8] sm:$0xff]
        %v815 = vld [vmem:[%s812 + $0x10] sm:$0xff]
        %v816 = vld [vmem:[%s812 + $0x18] sm:$0xff]
        %v817 = vld [vmem:[%s812 + $0x20] sm:$0xff]
        %v818 = vld [vmem:[%s812 + $0x28] sm:$0xff]
        %v819 = vld [vmem:[%s812 + $0x30] sm:$0xff]
        %v820 = vld [vmem:[%s812 + $0x38] sm:$0xff]
        %v821 = vld [vmem:[%s812 + $0x40] sm:$0xff]
        %v822 = vld [vmem:[%s812 + $0x48] sm:$0xff]
        %v823 = vld [vmem:[%s812 + $0x50] sm:$0xff]
        %v824 = vld [vmem:[%s812 + $0x58] sm:$0xff]
        %v825 = vld [vmem:[%s812 + $0x60] sm:$0xff]
        %v826 = vld [vmem:[%s812 + $0x68] sm:$0xff]
        %v827 = vld [vmem:[%s812 + $0x70] sm:$0xff]
        %v828 = vld [vmem:[%s812 + $0x78] sm:$0xff]
        %829 = vmatprep.subr.mxu0 0.0
        %830 = vmatpush1.msra.mxu0 %v813
        %831 = vmatprep.subr.mxu0 0.0
        %832 = vmatpush1.msra.mxu0 %v814
        %833 = vmatprep.subr.mxu0 0.0
        %834 = vmatpush1.msra.mxu0 %v815
        %835 = vmatprep.subr.mxu0 0.0
        %836 = vmatpush1.msra.mxu0 %v816
        %837 = vmatprep.subr.mxu0 0.0
        %838 = vmatpush1.msra.mxu0 %v817
        %839 = vmatprep.subr.mxu0 0.0
        %840 = vmatpush1.msra.mxu0 %v818
        %841 = vmatprep.subr.mxu0 0.0
        %842 = vmatpush1.msra.mxu0 %v819
        %843 = vmatprep.subr.mxu0 0.0
        %844 = vmatpush1.msra.mxu0 %v820
        %845 = vmatprep.subr.mxu0 0.0
        %846 = vmatpush1.msra.mxu0 %v821
        %847 = vmatprep.subr.mxu0 0.0
        %848 = vmatpush1.msra.mxu0 %v822
        %849 = vmatprep.subr.mxu0 0.0
        %850 = vmatpush1.msra.mxu0 %v823
        %851 = vmatprep.subr.mxu0 0.0
        %852 = vmatpush1.msra.mxu0 %v824
        %853 = vmatprep.subr.mxu0 0.0
        %854 = vmatpush1.msra.mxu0 %v825
        %855 = vmatprep.subr.mxu0 0.0
        %856 = vmatpush1.msra.mxu0 %v826
        %857 = vmatprep.subr.mxu0 0.0
        %858 = vmatpush1.msra.mxu0 %v827
        %859 = vmatprep.subr.mxu0 0.0
        %860 = vmatpush1.msra.mxu0 %v828
        %861 = vmatprep.subr.mxu0 0.0
        %862 = vmatpush1.msra.mxu0 0.0
        %863 = vmatprep.subr.mxu0 0.0
        %864 = vmatpush1.msra.mxu0 0.0
        %865 = vmatprep.subr.mxu0 0.0
        %866 = vmatpush1.msra.mxu0 0.0
        %867 = vmatprep.subr.mxu0 0.0
        %868 = vmatpush1.msra.mxu0 0.0
        %869 = vmatprep.subr.mxu0 0.0
        %870 = vmatpush1.msra.mxu0 0.0
        %871 = vmatprep.subr.mxu0 0.0
        %872 = vmatpush1.msra.mxu0 0.0
        %873 = vmatprep.subr.mxu0 0.0
        %874 = vmatpush1.msra.mxu0 0.0
        %875 = vmatprep.subr.mxu0 0.0
        %876 = vmatpush1.msra.mxu0 0.0
        %877 = vmatprep.subr.mxu0 0.0
        %878 = vmatpush1.msra.mxu0 0.0
        %879 = vmatprep.subr.mxu0 0.0
        %880 = vmatpush1.msra.mxu0 0.0
        %881 = vmatprep.subr.mxu0 0.0
        %882 = vmatpush1.msra.mxu0 0.0
        %883 = vmatprep.subr.mxu0 0.0
        %884 = vmatpush1.msra.mxu0 0.0
        %885 = vmatprep.subr.mxu0 0.0
        %886 = vmatpush1.msra.mxu0 0.0
        %887 = vmatprep.subr.mxu0 0.0
        %888 = vmatpush1.msra.mxu0 0.0
        %889 = vmatprep.subr.mxu0 0.0
        %890 = vmatpush1.msra.mxu0 0.0
        %891 = vmatprep.subr.mxu0 0.0
        %892 = vmatpush1.msra.mxu0 0.0
        %893 = vmatprep.mubr.f32.mxu0 0.0
        %894 = vmatmul.mubr.f32.gmra.mrb[0].mxu0 %v810
        %v895 = vpop.f32.mrb[0].mxu0
        %v896 = vadd.f32 0.0, %v895
        %v897 = vpop.f32.mrb[0].mxu0
        %898 = vmatprep.mubr.f32.mxu0 0.0
        %899 = vmatmul.mubr.f32.gmra.mrb[0].mxu0 %v811
        %v900 = vpop.f32.mrb[0].mxu0
        %v901 = vadd.f32 0.0, %v900
        %v902 = vpop.f32.mrb[0].mxu0
        %903 = vdwg.mxu0
        %v904 = vadd.f32 %v804, %v896
        %v905 = vadd.f32 %v805, %v901
        %v906 = vmax.f32 %v904, 0.0
        %v907 = vmax.f32 %v905, 0.0
        %908 = vst [vmem:[%s271] sm:$0xff] %v906
        %909 = vst [vmem:[%s271 + $0x8] sm:$0xff] %v907
        %s910 = sand.u32 %s141, 1
        %s911 = scalar_lea.sflag [#allocation4], %s910
        %s912 = sand.u32 %s141, 1
        %s913 = smul.addr %s912, 16
        %s914 = scalar_lea.vmem [#allocation8], %s913
        // Predicated region
        $region53: #{tpu_custom_call.1} parent=39 // pred_check
          %p915 = pneg %p151
        $region54: #{tpu_custom_call.1} parent=39 // pred_check_branch
          %917 = sbr.rel (%p915) target = $region56
        $region55: #{tpu_custom_call.1} parent=39 // pred_region
          %s919 = ssub.s32 256, 256
          %920 = vsyncadd %s911, %s919
          %s921 = smul.addr %s23, 2
          %s922 = smul.addr %s921, 128
          %s923 = scalar_lea.hbm %s5, %s922
          %s924 = sshll.u32 %s914, 4
          %s925 = int_to_ptr.vmem [resolvable:$true] %s924
          %930 = dma.vmem_to_hbm [thread:$0]  %s925, 256, %s923, %s911, 128, 128, 8
        $region56: #{tpu_custom_call.1} parent=39 // pred_fallthru
          _
      $region40: #{tpu_custom_call.1} parent=5 // pred_fallthru
        _
      %p931 = scmp.le.s32.totalorder 2, %s18
      // Predicated region
      $region57: #{tpu_custom_call.1} parent=5 // pred_check
        %p932 = pneg %p931
      $region58: #{tpu_custom_call.1} parent=5 // pred_check_branch
        %934 = sbr.rel (%p932) target = $region60
      $region59: #{tpu_custom_call.1} parent=5 // pred_region
        %s935 = ssub.s32 %s18, 2
        // Predicated region
        $region61: #{tpu_custom_call.1} parent=59 // pred_check
          %p936 = pneg %p157
        $region62: #{tpu_custom_call.1} parent=59 // pred_check_branch
          %938 = sbr.rel (%p936) target = $region64
        $region63: #{tpu_custom_call.1} parent=59 // pred_region
          %s939 = sand.u32 %s142, 1
          %s940 = scalar_lea.sflag [#allocation4], %s939
          %s941 = sand.u32 %s142, 1
          %s942 = smul.addr %s941, 16
          %s943 = scalar_lea.vmem [#allocation8], %s942
          %944 = dma.done %s940, 256
        $region64: #{tpu_custom_call.1} parent=59 // pred_fallthru
          _
      $region60: #{tpu_custom_call.1} parent=5 // pred_fallthru
        _
    $region6: #{tpu_custom_call.1} parent=1 // loop_footer
      %s22 = sadd.s32 1, %s18
    $region7: #{tpu_custom_call.1} parent=1 // loop_footer_branch
      %17 = sbr.rel target = $region3
    $region8: #{tpu_custom_call.1} parent=1 // loop_exit
      _
    %945 = vsyncpa [#allocation3], 1
    %s946 = scalar_lea.sflag [#allocation3], 1
    %947 = vsyncpa %s946, 1
    %948 = vsyncpa [#allocation6], 1
    %949 = vsyncpa [#allocation4], 1
    %s950 = scalar_lea.sflag [#allocation4], 1
    %951 = vsyncpa %s950, 1

</llo_original>
